<compile_context>
chip_gen: v6e
topology: v6e:2x2x1
jax: 0.10.0
libtpu: 0.0.40
codegen_flags: <defaults>
</compile_context>

<pallas_src>
import jax
import jax.numpy as jnp
from jax.experimental import pallas as pl
from jax.experimental.pallas import tpu as pltpu

N_CLASSES = 10
N_PAD = 128            # lane-dense output width (multiple of 128 lanes)


def _round_up(x, m):
    return ((x + m - 1) // m) * m


def linear_sigmoid_kernel(x_ref, w_ref, b_ref, o_ref):
    # x_ref: [TB, K]   flattened image tile (double-buffered across grid steps)
    # w_ref: [K, N_PAD] transposed + lane-padded torch weight (VMEM-resident)
    # b_ref: [1, N_PAD] lane-padded bias (VMEM-resident)
    # o_ref: [TB, N_PAD]
    y = jnp.dot(x_ref[...], w_ref[...], preferred_element_type=jnp.float32)
    y = y + b_ref[...]
    o_ref[...] = jax.nn.sigmoid(y).astype(o_ref.dtype)


def prepare_params(weight, bias):
    """One-time parameter prep (outside the per-call path): W^T + lane padding.

    weight: [10, 784] (torch layout), bias: [10]
    returns w_t_pad: [784, 128], b_pad: [1, 128]
    """
    n, k = weight.shape
    w_t_pad = jnp.zeros((k, N_PAD), dtype=jnp.float32).at[:, :n].set(weight.T)
    b_pad = jnp.zeros((1, N_PAD), dtype=jnp.float32).at[0, :n].set(bias)
    return w_t_pad, b_pad


@jax.jit
def model_forward(img, w_t_pad, b_pad):
    """img: [B, C, H, W] float32; w_t_pad: [784, 128]; b_pad: [1, 128] -> [B, 10]."""
    B = img.shape[0]
    K = img.shape[-3] * img.shape[-2] * img.shape[-1]   # 1*28*28 = 784

    x = img.reshape(B, K).astype(jnp.float32)            # flatten(start_dim=-3)

    # Batch tile: multiple of 8 sublanes, capped at 512 rows (~85% of HBM
    # roofline per the tile-size data). Pad B so the grid divides evenly.
    TB = min(512, _round_up(B, 8))
    B_pad = _round_up(B, TB)
    if B_pad != B:
        x = jnp.pad(x, ((0, B_pad - B), (0, 0)))

    grid = (B_pad // TB,)
    cost = pl.CostEstimate(
        flops=2 * B_pad * K * N_PAD,
        transcendentals=B_pad * N_PAD,
        bytes_accessed=4 * (B_pad * K + K * N_PAD + N_PAD + B_pad * N_PAD),
    )

    out = pl.pallas_call(
        linear_sigmoid_kernel,
        out_shape=jax.ShapeDtypeStruct((B_pad, N_PAD), jnp.float32),
        grid_spec=pltpu.PrefetchScalarGridSpec(
            num_scalar_prefetch=0,
            grid=grid,
            in_specs=[
                # Activations: tiled along the batch grid axis (pipelined DMA).
                pl.BlockSpec((TB, K), lambda i: (i, 0)),
                # Weights / bias: constant index_map -> stay resident in VMEM.
                pl.BlockSpec((K, N_PAD), lambda i: (0, 0)),
                pl.BlockSpec((1, N_PAD), lambda i: (0, 0)),
            ],
            out_specs=pl.BlockSpec((TB, N_PAD), lambda i: (i, 0)),
        ),
        compiler_params=pltpu.CompilerParams(
            dimension_semantics=("parallel",)),   # megacore on v7x
        cost_estimate=cost,
    )(x, w_t_pad, b_pad)

    # Drop batch padding and the lane padding (N_PAD -> 10 real classes).
    return out[:B, :N_CLASSES]


def get_guess(x):
    # Model.get_guess: argmax over the class dimension (plain JAX glue).
    return jnp.argmax(x, axis=-1)


if __name__ == "__main__":
    key = jax.random.PRNGKey(0)
    k_img, k_w, k_b = jax.random.split(key, 3)

    B, C, H, W = 2, 1, 28, 28
    in_features = C * H * W   # 784
    out_features = 10

    # Deterministic parameter init (matches nn.Linear's uniform(-1/sqrt(K), 1/sqrt(K)) range).
    bound = 1.0 / jnp.sqrt(jnp.float32(in_features))
    weight = jax.random.uniform(k_w, (out_features, in_features),
                                dtype=jnp.float32, minval=-bound, maxval=bound)
    bias = jax.random.uniform(k_b, (out_features,),
                              dtype=jnp.float32, minval=-bound, maxval=bound)

    img = jax.random.normal(k_img, (B, C, H, W), dtype=jnp.float32)

    # Parameter prep done ONCE (not per forward call).
    w_t_pad, b_pad = prepare_params(weight, bias)

    out = model_forward(img, w_t_pad, b_pad)
    out = jax.block_until_ready(out)

    # Reference check in plain JAX.
    ref = jax.nn.sigmoid(img.reshape(B, -1) @ weight.T + bias)
    assert out.shape == (B, out_features)
    assert jnp.allclose(out, ref, atol=1e-5, rtol=1e-5)
    _ = jax.block_until_ready(get_guess(out))

    print("KERNEL_OK")
</pallas_src>

<mosaic_0001>
module attributes {stable_mosaic.version = 11 : i64} {
  func.func @linear_sigmoid_kernel(%arg0: i32, %arg1: memref<8x784xf32, #tpu.memory_space<vmem>>, %arg2: memref<784x128xf32, #tpu.memory_space<vmem>>, %arg3: memref<1x128xf32, #tpu.memory_space<vmem>>, %arg4: memref<8x128xf32, #tpu.memory_space<vmem>>) attributes {dimension_semantics = [#tpu.dimension_semantics<parallel>], iteration_bounds = array<i64: 1>, scalar_prefetch = 0 : i64, scratch_operands = 0 : i64, tpu.core_type = #tpu.core_type<tc>, window_params = [{transform_indices = @transform_0, window_bounds = array<i64: 8, 784>}, {pipeline_mode = #tpu.pipeline_mode<synchronous>, transform_indices = @transform_1, window_bounds = array<i64: 784, 128>}, {pipeline_mode = #tpu.pipeline_mode<synchronous>, transform_indices = @transform_2, window_bounds = array<i64: 1, 128>}, {transform_indices = @transform_3, window_bounds = array<i64: 8, 128>}]} {
    %c0 = arith.constant 0 : index
    %c0_0 = arith.constant 0 : index
    %0 = vector.load %arg1[%c0, %c0_0] : memref<8x784xf32, #tpu.memory_space<vmem>>, vector<8x784xf32>
    %c0_1 = arith.constant 0 : index
    %c0_2 = arith.constant 0 : index
    %1 = vector.load %arg2[%c0_1, %c0_2] : memref<784x128xf32, #tpu.memory_space<vmem>>, vector<784x128xf32>
    %cst = arith.constant dense<0.000000e+00> : vector<8x128xf32>
    %2 = tpu.matmul %0, %1, %cst {dimension_numbers = #tpu.dot_dimension_numbers<[1], [0], [0], [1], [0, 0, 1, 1], [], []>} : vector<8x784xf32>, vector<784x128xf32>, vector<8x128xf32> -> vector<8x128xf32>
    %c0_3 = arith.constant 0 : index
    %c0_4 = arith.constant 0 : index
    %3 = vector.load %arg3[%c0_3, %c0_4] : memref<1x128xf32, #tpu.memory_space<vmem>>, vector<1x128xf32>
    %4 = vector.broadcast %3 : vector<1x128xf32> to vector<8x128xf32>
    %5 = arith.addf %2, %4 : vector<8x128xf32>
    %6 = arith.negf %5 : vector<8x128xf32>
    %7 = math.exp %6 : vector<8x128xf32>
    %cst_5 = arith.constant 1.000000e+00 : f32
    %8 = vector.broadcast %cst_5 : f32 to vector<8x128xf32>
    %9 = arith.addf %8, %7 : vector<8x128xf32>
    %10 = arith.divf %8, %9 : vector<8x128xf32>
    %c0_6 = arith.constant 0 : index
    %c0_7 = arith.constant 0 : index
    %11 = vector.load %arg4[%c0_6, %c0_7] : memref<8x128xf32, #tpu.memory_space<vmem>>, vector<8x128xf32>
    tpu.vector_store %arg4[%c0_6, %c0_7], %10 {strides = array<i32>} : memref<8x128xf32, #tpu.memory_space<vmem>>, vector<8x128xf32>,
    return
  }
  func.func @transform_0(%arg0: i32) -> (i32, i32) {
    %c0_i32 = arith.constant 0 : i32
    %c0_i32_0 = arith.constant 0 : i32
    return %arg0, %c0_i32 : i32, i32
  }
  func.func @transform_1(%arg0: i32) -> (i32, i32) {
    %c0_i32 = arith.constant 0 : i32
    %c0_i32_0 = arith.constant 0 : i32
    %c0_i32_1 = arith.constant 0 : i32
    return %c0_i32, %c0_i32_0 : i32, i32
  }
  func.func @transform_2(%arg0: i32) -> (i32, i32) {
    %c0_i32 = arith.constant 0 : i32
    %c0_i32_0 = arith.constant 0 : i32
    %c0_i32_1 = arith.constant 0 : i32
    return %c0_i32, %c0_i32_0 : i32, i32
  }
  func.func @transform_3(%arg0: i32) -> (i32, i32) {
    %c0_i32 = arith.constant 0 : i32
    %c0_i32_0 = arith.constant 0 : i32
    return %arg0, %c0_i32 : i32, i32
  }
}

</mosaic_0001>

<llo_original>
// kernel: model_forward.1
$region0: #{model_forward.1}
  #allocation0 [shape = 'u32[]', space=smem, size = 0x4, offset = 0x4, fixed_abs, tag = 'smem constant byte address 0x4 - core index']
  #allocation1 [shape = 'u32[144,128]{1,0:T(1,128)}', space=vmem, size = 0x12000, scoped, tag = 'internal scratch']
  %s0 = inlined_call_operand.vmem [shape: f32[8,784], index: 0, kind: input, shape index: {}]
  %s1 = inlined_call_operand.hbm [shape: f32[784,128], index: 1, kind: input, shape index: {}]
  %s2 = inlined_call_operand.vmem [shape: f32[1,128], index: 2, kind: input, shape index: {}]
  %s3 = inlined_call_operand.vmem [shape: f32[8,128], index: 3, kind: output, shape index: {}]
  %s4 = sld [smem:[#allocation0]]
  $region26: #{model_forward.1} parent=0
    _
  %s6 = ssub.s32 1, %s4
  %s7 = scalar_select 0, %s6, %s4
  $region1: #{model_forward.1} parent=0
    #allocation2 [shape = 'u8[401408]{0}', space=vmem, size = 0x62000, scoped, tag = 'input window, operand 1, single buffered']
    #allocation3 [shape = 's32[1]{0}', space=sflag, size = 0x4, scoped, tag = 'scoped memory for model_forward.1']
    %8 = vsyncpa [#allocation3], 0
    // Predicated region
    $region2: #{model_forward.1} parent=1 // pred_check
      _
    $region3: #{model_forward.1} parent=1 // pred_check_branch
      %10 = sbr.rel (0) target = $region5
    $region4: #{model_forward.1} parent=1 // pred_region
      _
    $region5: #{model_forward.1} parent=1 // pred_fallthru
      _
    // Predicated region
    $region6: #{model_forward.1} parent=1 // pred_check
      _
    $region7: #{model_forward.1} parent=1 // pred_check_branch
      %12 = sbr.rel (0) target = $region9
    $region8: #{model_forward.1} parent=1 // pred_region
      %s14 = ssub.s32 12544, 12544
      %15 = vsyncadd [#allocation3], %s14
      %s16 = sshll.u32 [#allocation2], 4
      %s17 = int_to_ptr.vmem [resolvable:$true] %s16
      %22 = dma.hbm_to_vmem [thread:$0]  %s1, 12544, %s17, [#allocation3], 128, 128, 8
    $region9: #{model_forward.1} parent=1 // pred_fallthru
      _
    // Predicated region
    $region10: #{model_forward.1} parent=1 // pred_check
      _
    $region11: #{model_forward.1} parent=1 // pred_check_branch
      %24 = sbr.rel (0) target = $region13
    $region12: #{model_forward.1} parent=1 // pred_region
      _
    $region13: #{model_forward.1} parent=1 // pred_fallthru
      _
    // Predicated region
    $region14: #{model_forward.1} parent=1 // pred_check
      _
    $region15: #{model_forward.1} parent=1 // pred_check_branch
      %26 = sbr.rel (0) target = $region17
    $region16: #{model_forward.1} parent=1 // pred_region
      %27 = dma.done [#allocation3], 12544
    $region17: #{model_forward.1} parent=1 // pred_fallthru
      _
    %v28 = vld [vmem:[%s0] sm:$0xff]
    %v29 = vld [vmem:[%s0 + $0x8] sm:$0xff]
    %v30 = vld [vmem:[%s0 + $0x10] sm:$0xff]
    %v31 = vld [vmem:[%s0 + $0x18] sm:$0xff]
    %v32 = vld [vmem:[%s0 + $0x20] sm:$0xff]
    %v33 = vld [vmem:[%s0 + $0x28] sm:$0xff]
    %v34 = vld [vmem:[%s0 + $0x30] sm:$0xff]
    %v35 = vld [vmem:[#allocation2] sm:$0xff]
    %v36 = vld [vmem:[#allocation2 + $0x8] sm:$0xff]
    %v37 = vld [vmem:[#allocation2 + $0x10] sm:$0xff]
    %v38 = vld [vmem:[#allocation2 + $0x18] sm:$0xff]
    %v39 = vld [vmem:[#allocation2 + $0x20] sm:$0xff]
    %v40 = vld [vmem:[#allocation2 + $0x28] sm:$0xff]
    %v41 = vld [vmem:[#allocation2 + $0x30] sm:$0xff]
    %v42 = vld [vmem:[#allocation2 + $0x38] sm:$0xff]
    %v43 = vld [vmem:[#allocation2 + $0x40] sm:$0xff]
    %v44 = vld [vmem:[#allocation2 + $0x48] sm:$0xff]
    %v45 = vld [vmem:[#allocation2 + $0x50] sm:$0xff]
    %v46 = vld [vmem:[#allocation2 + $0x58] sm:$0xff]
    %v47 = vld [vmem:[#allocation2 + $0x60] sm:$0xff]
    %v48 = vld [vmem:[#allocation2 + $0x68] sm:$0xff]
    %v49 = vld [vmem:[#allocation2 + $0x70] sm:$0xff]
    %v50 = vld [vmem:[#allocation2 + $0x78] sm:$0xff]
    %v51 = vld [vmem:[#allocation2 + $0x80] sm:$0xff]
    %v52 = vld [vmem:[#allocation2 + $0x88] sm:$0xff]
    %v53 = vld [vmem:[#allocation2 + $0x90] sm:$0xff]
    %v54 = vld [vmem:[#allocation2 + $0x98] sm:$0xff]
    %v55 = vld [vmem:[#allocation2 + $0xa0] sm:$0xff]
    %v56 = vld [vmem:[#allocation2 + $0xa8] sm:$0xff]
    %v57 = vld [vmem:[#allocation2 + $0xb0] sm:$0xff]
    %v58 = vld [vmem:[#allocation2 + $0xb8] sm:$0xff]
    %v59 = vld [vmem:[#allocation2 + $0xc0] sm:$0xff]
    %v60 = vld [vmem:[#allocation2 + $0xc8] sm:$0xff]
    %v61 = vld [vmem:[#allocation2 + $0xd0] sm:$0xff]
    %v62 = vld [vmem:[#allocation2 + $0xd8] sm:$0xff]
    %v63 = vld [vmem:[#allocation2 + $0xe0] sm:$0xff]
    %v64 = vld [vmem:[#allocation2 + $0xe8] sm:$0xff]
    %v65 = vld [vmem:[#allocation2 + $0xf0] sm:$0xff]
    %v66 = vld [vmem:[#allocation2 + $0xf8] sm:$0xff]
    %v67 = vld [vmem:[#allocation2 + $0x100] sm:$0xff]
    %v68 = vld [vmem:[#allocation2 + $0x108] sm:$0xff]
    %v69 = vld [vmem:[#allocation2 + $0x110] sm:$0xff]
    %v70 = vld [vmem:[#allocation2 + $0x118] sm:$0xff]
    %v71 = vld [vmem:[#allocation2 + $0x120] sm:$0xff]
    %v72 = vld [vmem:[#allocation2 + $0x128] sm:$0xff]
    %v73 = vld [vmem:[#allocation2 + $0x130] sm:$0xff]
    %v74 = vld [vmem:[#allocation2 + $0x138] sm:$0xff]
    %v75 = vld [vmem:[#allocation2 + $0x140] sm:$0xff]
    %v76 = vld [vmem:[#allocation2 + $0x148] sm:$0xff]
    %v77 = vld [vmem:[#allocation2 + $0x150] sm:$0xff]
    %v78 = vld [vmem:[#allocation2 + $0x158] sm:$0xff]
    %v79 = vld [vmem:[#allocation2 + $0x160] sm:$0xff]
    %v80 = vld [vmem:[#allocation2 + $0x168] sm:$0xff]
    %v81 = vld [vmem:[#allocation2 + $0x170] sm:$0xff]
    %v82 = vld [vmem:[#allocation2 + $0x178] sm:$0xff]
    %v83 = vld [vmem:[#allocation2 + $0x180] sm:$0xff]
    %v84 = vld [vmem:[#allocation2 + $0x188] sm:$0xff]
    %v85 = vld [vmem:[#allocation2 + $0x190] sm:$0xff]
    %v86 = vld [vmem:[#allocation2 + $0x198] sm:$0xff]
    %v87 = vld [vmem:[#allocation2 + $0x1a0] sm:$0xff]
    %v88 = vld [vmem:[#allocation2 + $0x1a8] sm:$0xff]
    %v89 = vld [vmem:[#allocation2 + $0x1b0] sm:$0xff]
    %v90 = vld [vmem:[#allocation2 + $0x1b8] sm:$0xff]
    %v91 = vld [vmem:[#allocation2 + $0x1c0] sm:$0xff]
    %v92 = vld [vmem:[#allocation2 + $0x1c8] sm:$0xff]
    %v93 = vld [vmem:[#allocation2 + $0x1d0] sm:$0xff]
    %v94 = vld [vmem:[#allocation2 + $0x1d8] sm:$0xff]
    %v95 = vld [vmem:[#allocation2 + $0x1e0] sm:$0xff]
    %v96 = vld [vmem:[#allocation2 + $0x1e8] sm:$0xff]
    %v97 = vld [vmem:[#allocation2 + $0x1f0] sm:$0xff]
    %v98 = vld [vmem:[#allocation2 + $0x1f8] sm:$0xff]
    %v99 = vld [vmem:[#allocation2 + $0x200] sm:$0xff]
    %v100 = vld [vmem:[#allocation2 + $0x208] sm:$0xff]
    %v101 = vld [vmem:[#allocation2 + $0x210] sm:$0xff]
    %v102 = vld [vmem:[#allocation2 + $0x218] sm:$0xff]
    %v103 = vld [vmem:[#allocation2 + $0x220] sm:$0xff]
    %v104 = vld [vmem:[#allocation2 + $0x228] sm:$0xff]
    %v105 = vld [vmem:[#allocation2 + $0x230] sm:$0xff]
    %v106 = vld [vmem:[#allocation2 + $0x238] sm:$0xff]
    %v107 = vld [vmem:[#allocation2 + $0x240] sm:$0xff]
    %v108 = vld [vmem:[#allocation2 + $0x248] sm:$0xff]
    %v109 = vld [vmem:[#allocation2 + $0x250] sm:$0xff]
    %v110 = vld [vmem:[#allocation2 + $0x258] sm:$0xff]
    %v111 = vld [vmem:[#allocation2 + $0x260] sm:$0xff]
    %v112 = vld [vmem:[#allocation2 + $0x268] sm:$0xff]
    %v113 = vld [vmem:[#allocation2 + $0x270] sm:$0xff]
    %v114 = vld [vmem:[#allocation2 + $0x278] sm:$0xff]
    %v115 = vld [vmem:[#allocation2 + $0x280] sm:$0xff]
    %v116 = vld [vmem:[#allocation2 + $0x288] sm:$0xff]
    %v117 = vld [vmem:[#allocation2 + $0x290] sm:$0xff]
    %v118 = vld [vmem:[#allocation2 + $0x298] sm:$0xff]
    %v119 = vld [vmem:[#allocation2 + $0x2a0] sm:$0xff]
    %v120 = vld [vmem:[#allocation2 + $0x2a8] sm:$0xff]
    %v121 = vld [vmem:[#allocation2 + $0x2b0] sm:$0xff]
    %v122 = vld [vmem:[#allocation2 + $0x2b8] sm:$0xff]
    %v123 = vld [vmem:[#allocation2 + $0x2c0] sm:$0xff]
    %v124 = vld [vmem:[#allocation2 + $0x2c8] sm:$0xff]
    %v125 = vld [vmem:[#allocation2 + $0x2d0] sm:$0xff]
    %v126 = vld [vmem:[#allocation2 + $0x2d8] sm:$0xff]
    %v127 = vld [vmem:[#allocation2 + $0x2e0] sm:$0xff]
    %v128 = vld [vmem:[#allocation2 + $0x2e8] sm:$0xff]
    %v129 = vld [vmem:[#allocation2 + $0x2f0] sm:$0xff]
    %v130 = vld [vmem:[#allocation2 + $0x2f8] sm:$0xff]
    %v131 = vld [vmem:[#allocation2 + $0x300] sm:$0xff]
    %v132 = vld [vmem:[#allocation2 + $0x308] sm:$0xff]
    %v133 = vld [vmem:[%s2] sm:$0x1]
    %v135 = vlaneseq
    %v136 = vshrl.u32 %v135, 7
    %v137 = vsub.s32 0, %v136
    %v138 = vrot.slane %v133, %v137
    %vm140 = vcmask 130048
    %v142 = vsel %vm140, %v34, 0
    %144 = vmatprep.subr.mxu0 0.0
    %145 = vmatpush1.msra.mxu0 %v50
    %146 = vmatprep.subr.mxu0 0.0
    %147 = vmatpush1.msra.mxu0 %v49
    %148 = vmatprep.subr.mxu0 0.0
    %149 = vmatpush1.msra.mxu0 %v48
    %150 = vmatprep.subr.mxu0 0.0
    %151 = vmatpush1.msra.mxu0 %v47
    %152 = vmatprep.subr.mxu0 0.0
    %153 = vmatpush1.msra.mxu0 %v46
    %154 = vmatprep.subr.mxu0 0.0
    %155 = vmatpush1.msra.mxu0 %v45
    %156 = vmatprep.subr.mxu0 0.0
    %157 = vmatpush1.msra.mxu0 %v44
    %158 = vmatprep.subr.mxu0 0.0
    %159 = vmatpush1.msra.mxu0 %v43
    %160 = vmatprep.subr.mxu0 0.0
    %161 = vmatpush1.msra.mxu0 %v42
    %162 = vmatprep.subr.mxu0 0.0
    %163 = vmatpush1.msra.mxu0 %v41
    %164 = vmatprep.subr.mxu0 0.0
    %165 = vmatpush1.msra.mxu0 %v40
    %166 = vmatprep.subr.mxu0 0.0
    %167 = vmatpush1.msra.mxu0 %v39
    %168 = vmatprep.subr.mxu0 0.0
    %169 = vmatpush1.msra.mxu0 %v38
    %170 = vmatprep.subr.mxu0 0.0
    %171 = vmatpush1.msra.mxu0 %v37
    %172 = vmatprep.subr.mxu0 0.0
    %173 = vmatpush1.msra.mxu0 %v36
    %174 = vmatprep.subr.mxu0 0.0
    %175 = vmatpush1.msra.mxu0 %v35
    %176 = vmatprep.subr.mxu0 0.0
    %177 = vmatpush2.msra.mxu0 %v66
    %178 = vmatprep.subr.mxu0 0.0
    %179 = vmatpush2.msra.mxu0 %v65
    %180 = vmatprep.subr.mxu0 0.0
    %181 = vmatpush2.msra.mxu0 %v64
    %182 = vmatprep.subr.mxu0 0.0
    %183 = vmatpush2.msra.mxu0 %v63
    %184 = vmatprep.subr.mxu0 0.0
    %185 = vmatpush2.msra.mxu0 %v62
    %186 = vmatprep.subr.mxu0 0.0
    %187 = vmatpush2.msra.mxu0 %v61
    %188 = vmatprep.subr.mxu0 0.0
    %189 = vmatpush2.msra.mxu0 %v60
    %190 = vmatprep.subr.mxu0 0.0
    %191 = vmatpush2.msra.mxu0 %v59
    %192 = vmatprep.subr.mxu0 0.0
    %193 = vmatpush2.msra.mxu0 %v58
    %194 = vmatprep.subr.mxu0 0.0
    %195 = vmatpush2.msra.mxu0 %v57
    %196 = vmatprep.subr.mxu0 0.0
    %197 = vmatpush2.msra.mxu0 %v56
    %198 = vmatprep.subr.mxu0 0.0
    %199 = vmatpush2.msra.mxu0 %v55
    %200 = vmatprep.subr.mxu0 0.0
    %201 = vmatpush2.msra.mxu0 %v54
    %202 = vmatprep.subr.mxu0 0.0
    %203 = vmatpush2.msra.mxu0 %v53
    %204 = vmatprep.subr.mxu0 0.0
    %205 = vmatpush2.msra.mxu0 %v52
    %206 = vmatprep.subr.mxu0 0.0
    %207 = vmatpush2.msra.mxu0 %v51
    %208 = vmatprep.mubr.f32.mxu0 %v29
    %209 = vmatmul.mubr.f32.gmra.mxu0 %v28
    %v210 = vpop.f32.mrf.mxu0
    %v211 = vadd.f32 %v138, %v210
    %v212 = vpop.f32.mrf.mxu0
    %213 = vdwg.mxu0
    %214 = vmatprep.subr.mxu0 0.0
    %215 = vmatpush1.msra.mxu0 %v82
    %216 = vmatprep.subr.mxu0 0.0
    %217 = vmatpush1.msra.mxu0 %v81
    %218 = vmatprep.subr.mxu0 0.0
    %219 = vmatpush1.msra.mxu0 %v80
    %220 = vmatprep.subr.mxu0 0.0
    %221 = vmatpush1.msra.mxu0 %v79
    %222 = vmatprep.subr.mxu0 0.0
    %223 = vmatpush1.msra.mxu0 %v78
    %224 = vmatprep.subr.mxu0 0.0
    %225 = vmatpush1.msra.mxu0 %v77
    %226 = vmatprep.subr.mxu0 0.0
    %227 = vmatpush1.msra.mxu0 %v76
    %228 = vmatprep.subr.mxu0 0.0
    %229 = vmatpush1.msra.mxu0 %v75
    %230 = vmatprep.subr.mxu0 0.0
    %231 = vmatpush1.msra.mxu0 %v74
    %232 = vmatprep.subr.mxu0 0.0
    %233 = vmatpush1.msra.mxu0 %v73
    %234 = vmatprep.subr.mxu0 0.0
    %235 = vmatpush1.msra.mxu0 %v72
    %236 = vmatprep.subr.mxu0 0.0
    %237 = vmatpush1.msra.mxu0 %v71
    %238 = vmatprep.subr.mxu0 0.0
    %239 = vmatpush1.msra.mxu0 %v70
    %240 = vmatprep.subr.mxu0 0.0
    %241 = vmatpush1.msra.mxu0 %v69
    %242 = vmatprep.subr.mxu0 0.0
    %243 = vmatpush1.msra.mxu0 %v68
    %244 = vmatprep.subr.mxu0 0.0
    %245 = vmatpush1.msra.mxu0 %v67
    %246 = vmatprep.subr.mxu0 0.0
    %247 = vmatpush2.msra.mxu0 %v98
    %248 = vmatprep.subr.mxu0 0.0
    %249 = vmatpush2.msra.mxu0 %v97
    %250 = vmatprep.subr.mxu0 0.0
    %251 = vmatpush2.msra.mxu0 %v96
    %252 = vmatprep.subr.mxu0 0.0
    %253 = vmatpush2.msra.mxu0 %v95
    %254 = vmatprep.subr.mxu0 0.0
    %255 = vmatpush2.msra.mxu0 %v94
    %256 = vmatprep.subr.mxu0 0.0
    %257 = vmatpush2.msra.mxu0 %v93
    %258 = vmatprep.subr.mxu0 0.0
    %259 = vmatpush2.msra.mxu0 %v92
    %260 = vmatprep.subr.mxu0 0.0
    %261 = vmatpush2.msra.mxu0 %v91
    %262 = vmatprep.subr.mxu0 0.0
    %263 = vmatpush2.msra.mxu0 %v90
    %264 = vmatprep.subr.mxu0 0.0
    %265 = vmatpush2.msra.mxu0 %v89
    %266 = vmatprep.subr.mxu0 0.0
    %267 = vmatpush2.msra.mxu0 %v88
    %268 = vmatprep.subr.mxu0 0.0
    %269 = vmatpush2.msra.mxu0 %v87
    %270 = vmatprep.subr.mxu0 0.0
    %271 = vmatpush2.msra.mxu0 %v86
    %272 = vmatprep.subr.mxu0 0.0
    %273 = vmatpush2.msra.mxu0 %v85
    %274 = vmatprep.subr.mxu0 0.0
    %275 = vmatpush2.msra.mxu0 %v84
    %276 = vmatprep.subr.mxu0 0.0
    %277 = vmatpush2.msra.mxu0 %v83
    %278 = vmatprep.mubr.f32.mxu0 %v31
    %279 = vmatmul.mubr.f32.gmra.mxu0 %v30
    %v280 = vpop.f32.mrf.mxu0
    %v281 = vadd.f32 %v211, %v280
    %v282 = vpop.f32.mrf.mxu0
    %283 = vdwg.mxu0
    %284 = vmatprep.subr.mxu0 0.0
    %285 = vmatpush1.msra.mxu0 %v114
    %286 = vmatprep.subr.mxu0 0.0
    %287 = vmatpush1.msra.mxu0 %v113
    %288 = vmatprep.subr.mxu0 0.0
    %289 = vmatpush1.msra.mxu0 %v112
    %290 = vmatprep.subr.mxu0 0.0
    %291 = vmatpush1.msra.mxu0 %v111
    %292 = vmatprep.subr.mxu0 0.0
    %293 = vmatpush1.msra.mxu0 %v110
    %294 = vmatprep.subr.mxu0 0.0
    %295 = vmatpush1.msra.mxu0 %v109
    %296 = vmatprep.subr.mxu0 0.0
    %297 = vmatpush1.msra.mxu0 %v108
    %298 = vmatprep.subr.mxu0 0.0
    %299 = vmatpush1.msra.mxu0 %v107
    %300 = vmatprep.subr.mxu0 0.0
    %301 = vmatpush1.msra.mxu0 %v106
    %302 = vmatprep.subr.mxu0 0.0
    %303 = vmatpush1.msra.mxu0 %v105
    %304 = vmatprep.subr.mxu0 0.0
    %305 = vmatpush1.msra.mxu0 %v104
    %306 = vmatprep.subr.mxu0 0.0
    %307 = vmatpush1.msra.mxu0 %v103
    %308 = vmatprep.subr.mxu0 0.0
    %309 = vmatpush1.msra.mxu0 %v102
    %310 = vmatprep.subr.mxu0 0.0
    %311 = vmatpush1.msra.mxu0 %v101
    %312 = vmatprep.subr.mxu0 0.0
    %313 = vmatpush1.msra.mxu0 %v100
    %314 = vmatprep.subr.mxu0 0.0
    %315 = vmatpush1.msra.mxu0 %v99
    %316 = vmatprep.subr.mxu0 0.0
    %317 = vmatpush2.msra.mxu0 %v130
    %318 = vmatprep.subr.mxu0 0.0
    %319 = vmatpush2.msra.mxu0 %v129
    %320 = vmatprep.subr.mxu0 0.0
    %321 = vmatpush2.msra.mxu0 %v128
    %322 = vmatprep.subr.mxu0 0.0
    %323 = vmatpush2.msra.mxu0 %v127
    %324 = vmatprep.subr.mxu0 0.0
    %325 = vmatpush2.msra.mxu0 %v126
    %326 = vmatprep.subr.mxu0 0.0
    %327 = vmatpush2.msra.mxu0 %v125
    %328 = vmatprep.subr.mxu0 0.0
    %329 = vmatpush2.msra.mxu0 %v124
    %330 = vmatprep.subr.mxu0 0.0
    %331 = vmatpush2.msra.mxu0 %v123
    %332 = vmatprep.subr.mxu0 0.0
    %333 = vmatpush2.msra.mxu0 %v122
    %334 = vmatprep.subr.mxu0 0.0
    %335 = vmatpush2.msra.mxu0 %v121
    %336 = vmatprep.subr.mxu0 0.0
    %337 = vmatpush2.msra.mxu0 %v120
    %338 = vmatprep.subr.mxu0 0.0
    %339 = vmatpush2.msra.mxu0 %v119
    %340 = vmatprep.subr.mxu0 0.0
    %341 = vmatpush2.msra.mxu0 %v118
    %342 = vmatprep.subr.mxu0 0.0
    %343 = vmatpush2.msra.mxu0 %v117
    %344 = vmatprep.subr.mxu0 0.0
    %345 = vmatpush2.msra.mxu0 %v116
    %346 = vmatprep.subr.mxu0 0.0
    %347 = vmatpush2.msra.mxu0 %v115
    %348 = vmatprep.mubr.f32.mxu0 %v33
    %349 = vmatmul.mubr.f32.gmra.mxu0 %v32
    %v350 = vpop.f32.mrf.mxu0
    %v351 = vadd.f32 %v281, %v350
    %v352 = vpop.f32.mrf.mxu0
    %353 = vdwg.mxu0
    %354 = vmatprep.subr.mxu0 0.0
    %355 = vmatpush1.msra.mxu0 0.0
    %356 = vmatprep.subr.mxu0 0.0
    %357 = vmatpush1.msra.mxu0 0.0
    %358 = vmatprep.subr.mxu0 0.0
    %359 = vmatpush1.msra.mxu0 0.0
    %360 = vmatprep.subr.mxu0 0.0
    %361 = vmatpush1.msra.mxu0 0.0
    %362 = vmatprep.subr.mxu0 0.0
    %363 = vmatpush1.msra.mxu0 0.0
    %364 = vmatprep.subr.mxu0 0.0
    %365 = vmatpush1.msra.mxu0 0.0
    %366 = vmatprep.subr.mxu0 0.0
    %367 = vmatpush1.msra.mxu0 0.0
    %368 = vmatprep.subr.mxu0 0.0
    %369 = vmatpush1.msra.mxu0 0.0
    %370 = vmatprep.subr.mxu0 0.0
    %371 = vmatpush1.msra.mxu0 0.0
    %372 = vmatprep.subr.mxu0 0.0
    %373 = vmatpush1.msra.mxu0 0.0
    %374 = vmatprep.subr.mxu0 0.0
    %375 = vmatpush1.msra.mxu0 0.0
    %376 = vmatprep.subr.mxu0 0.0
    %377 = vmatpush1.msra.mxu0 0.0
    %378 = vmatprep.subr.mxu0 0.0
    %379 = vmatpush1.msra.mxu0 0.0
    %380 = vmatprep.subr.mxu0 0.0
    %381 = vmatpush1.msra.mxu0 0.0
    %382 = vmatprep.subr.mxu0 0.0
    %383 = vmatpush1.msra.mxu0 %v132
    %384 = vmatprep.subr.mxu0 0.0
    %385 = vmatpush1.msra.mxu0 %v131
    %386 = vmatprep.subr.mxu0 0.0
    %387 = vmatpush2.msra.mxu0 0.0
    %388 = vmatprep.subr.mxu0 0.0
    %389 = vmatpush2.msra.mxu0 0.0
    %390 = vmatprep.subr.mxu0 0.0
    %391 = vmatpush2.msra.mxu0 0.0
    %392 = vmatprep.subr.mxu0 0.0
    %393 = vmatpush2.msra.mxu0 0.0
    %394 = vmatprep.subr.mxu0 0.0
    %395 = vmatpush2.msra.mxu0 0.0
    %396 = vmatprep.subr.mxu0 0.0
    %397 = vmatpush2.msra.mxu0 0.0
    %398 = vmatprep.subr.mxu0 0.0
    %399 = vmatpush2.msra.mxu0 0.0
    %400 = vmatprep.subr.mxu0 0.0
    %401 = vmatpush2.msra.mxu0 0.0
    %402 = vmatprep.subr.mxu0 0.0
    %403 = vmatpush2.msra.mxu0 0.0
    %404 = vmatprep.subr.mxu0 0.0
    %405 = vmatpush2.msra.mxu0 0.0
    %406 = vmatprep.subr.mxu0 0.0
    %407 = vmatpush2.msra.mxu0 0.0
    %408 = vmatprep.subr.mxu0 0.0
    %409 = vmatpush2.msra.mxu0 0.0
    %410 = vmatprep.subr.mxu0 0.0
    %411 = vmatpush2.msra.mxu0 0.0
    %412 = vmatprep.subr.mxu0 0.0
    %413 = vmatpush2.msra.mxu0 0.0
    %414 = vmatprep.subr.mxu0 0.0
    %415 = vmatpush2.msra.mxu0 0.0
    %416 = vmatprep.subr.mxu0 0.0
    %417 = vmatpush2.msra.mxu0 0.0
    %418 = vmatprep.mubr.f32.mxu0 0.0
    %419 = vmatmul.mubr.f32.gmra.mxu0 %v142
    %v420 = vpop.f32.mrf.mxu0
    %v421 = vadd.f32 %v351, %v420
    %v422 = vpop.f32.mrf.mxu0
    %423 = vdwg.mxu0
    %v424 = vxor.u32 %v421, 2147483648
    %v425 = vmul.f32 %v424, 1.442695
    %v426 = vpow.pop %v425
    %v427 = vadd.f32 %v426, 1.0
    %v428 = vrcp.pop %v427
    %v429 = vmul.f32 1.0, %v428
    %430 = vst [vmem:[%s3] sm:$0xff] %v429
    // Predicated region
    $region18: #{model_forward.1} parent=1 // pred_check
      _
    $region19: #{model_forward.1} parent=1 // pred_check_branch
      %432 = sbr.rel (0) target = $region21
    $region20: #{model_forward.1} parent=1 // pred_region
      _
    $region21: #{model_forward.1} parent=1 // pred_fallthru
      _
    // Predicated region
    $region22: #{model_forward.1} parent=1 // pred_check
      _
    $region23: #{model_forward.1} parent=1 // pred_check_branch
      %434 = sbr.rel (0) target = $region25
    $region24: #{model_forward.1} parent=1 // pred_region
      _
    $region25: #{model_forward.1} parent=1 // pred_fallthru
      _
    %435 = vsyncpa [#allocation3], 1

</llo_original>
